<compile_context>
chip_gen: v5e
topology: v5e:2x2
jax: 0.10.0
libtpu: 0.0.40
codegen_flags: <defaults>
</compile_context>

<pallas_src>
import functools

import jax
import jax.numpy as jnp
from jax import lax
from jax.experimental import pallas as pl
from jax.experimental.pallas import tpu as pltpu


def _round_up(n, m):
    return ((n + m - 1) // m) * m


def _cdiv(a, b):
    return -(-a // b)


def _pick_bb(B):
    """Images folded per grid step: keep >=2 steps (v7x megacore), cap for VMEM."""
    if B <= 1:
        return 1
    return max(1, min(16, _cdiv(B, 2)))


def _lce_kernel(H, W, BB):
    HW = H * W
    N = BB * HW

    def kernel(x_ref, w1t_ref, b1_ref, w23_ref, b23_ref, fc1t_ref, fc2t_ref,
               o_ref):
        # ---- conv1: 1x1 conv == (C_pad, C_in) @ (C_in, BB*HW) ----------------
        h1 = jnp.dot(w1t_ref[...], x_ref[...],
                     preferred_element_type=jnp.float32) + b1_ref[...]

        # ---- im2col for the fused 3x3->1x1 conv ------------------------------
        # Tap (dy, dx): output pixel p reads h1[:, p + dy*W + dx] when that
        # source pixel is in-bounds *within its own image*, else 0.  Shift =
        # XLU lane rotate over the whole folded-lane axis; masks come from the
        # per-image pixel id, so any batch-boundary wrap-around is always in a
        # masked (zeroed) position.
        lane = lax.broadcasted_iota(jnp.int32, (1, N), 1)
        pos = lane % HW                                     # per-image pixel id
        colp = pos % W                                      # pixel column

        pieces = []
        for ky in range(3):
            for kx in range(3):
                dy, dx = ky - 1, kx - 1
                s = dy * W + dx
                t = h1 if s == 0 else pltpu.roll(h1, shift=(-s) % N, axis=1)
                conds = []
                if dy == -1:
                    conds.append(pos >= W)
                elif dy == 1:
                    conds.append(pos < (H - 1) * W)
                if dx == -1:
                    conds.append(colp >= 1)
                elif dx == 1:
                    conds.append(colp < W - 1)
                if conds:
                    m = functools.reduce(jnp.logical_and, conds)
                    t = jnp.where(m, t, 0.0)
                pieces.append(t)                            # (C_pad, N) each
        col = jnp.concatenate(pieces, axis=0)               # (9*C_pad, N)

        # ---- fused conv2+conv3: one matmul, then LeakyReLU(0.2) --------------
        h3 = jnp.dot(w23_ref[...], col,
                     preferred_element_type=jnp.float32) + b23_ref[...]
        h3 = jnp.where(h3 >= 0.0, h3, 0.2 * h3)             # (C_out, N)

        # ---- squeeze-excite, batched over the BB folded images ---------------
        # GAP per image: HW-lane-aligned static slices + XLU lane reduce, then
        # the two FC matmuls run once with N = BB (not once per image).
        y = jnp.concatenate(
            [jnp.sum(h3[:, b * HW:(b + 1) * HW], axis=1, keepdims=True)
             for b in range(BB)], axis=1) * (1.0 / HW)      # (C_out, BB)
        z = jnp.maximum(
            jnp.dot(fc1t_ref[...], y, preferred_element_type=jnp.float32), 0.0)
        v = jnp.dot(fc2t_ref[...], z, preferred_element_type=jnp.float32)
        g = 1.0 / (1.0 + jnp.exp(-v))                        # (C_out, BB)

        # ---- channel-wise rescale; one lane-dense (C_out, BB*HW) store -------
        o = jnp.concatenate(
            [h3[:, b * HW:(b + 1) * HW] * g[:, b:b + 1] for b in range(BB)],
            axis=1)
        o_ref[...] = o.astype(o_ref.dtype)

    return kernel


def local_context_extractor(x_nchw, params, bb=None):
    """x_nchw: (B, C_in, H, W) float32. Returns (B, C_out, H, W)."""
    B, C_in, H, W = x_nchw.shape
    HW = H * W
    w1, b1, w2, b2, w3, b3, fc1, fc2 = (
        params["w1"], params["b1"], params["w2"], params["b2"],
        params["w3"], params["b3"], params["fc1"], params["fc2"])
    C_mid = w1.shape[1]
    C_out = w3.shape[1]
    C_hid = fc1.shape[1]
    C_pad = _round_up(C_mid, 8)          # sublane-align the mid channels

    BB = _pick_bb(B) if bb is None else bb
    n_tiles = _cdiv(B, BB)
    B_pad = n_tiles * BB
    N = BB * HW

    # --- exact offline fusions / layout prep (tiny, once per call) -----------
    w1t = jnp.zeros((C_pad, C_in), jnp.float32).at[:C_mid].set(w1.T)
    b1c = jnp.zeros((C_pad, 1), jnp.float32).at[:C_mid].set(
        b1.reshape(C_mid, 1))
    # conv3 folded into conv2:  w23[k] = w2[k] @ w3,  b23 = b2 @ w3 + b3.
    w23 = jnp.einsum("kio,oc->cki", w2, w3)                  # (C_out, 9, C_mid)
    w23 = jnp.pad(w23, ((0, 0), (0, 0), (0, C_pad - C_mid)))
    w23 = w23.reshape(C_out, 9 * C_pad)
    b23 = (b2 @ w3 + b3).reshape(C_out, 1)
    fc1t = fc1.T                                             # (C_hid, C_out)
    fc2t = fc2.T                                             # (C_out, C_hid)

    # Fold the batch onto the lane axis: (B, C_in, HW) -> (C_in, B_pad*HW).
    # (Wrapper-side layout plumbing; padded batch rows are sliced off at the end.)
    x = x_nchw.reshape(B, C_in, HW)
    if B_pad != B:
        x = jnp.pad(x, ((0, B_pad - B), (0, 0), (0, 0)))
    x = jnp.transpose(x, (1, 0, 2)).reshape(C_in, B_pad * HW)

    full = lambda shape: pl.BlockSpec(shape, lambda t: (0,) * len(shape))
    grid_spec = pltpu.PrefetchScalarGridSpec(
        num_scalar_prefetch=0,
        grid=(n_tiles,),
        in_specs=[
            pl.BlockSpec((C_in, N), lambda t: (0, t)),
            full((C_pad, C_in)),
            full((C_pad, 1)),
            full((C_out, 9 * C_pad)),
            full((C_out, 1)),
            full((C_hid, C_out)),
            full((C_out, C_hid)),
        ],
        out_specs=pl.BlockSpec((C_out, N), lambda t: (0, t)),
    )

    out = pl.pallas_call(
        _lce_kernel(H, W, BB),
        out_shape=jax.ShapeDtypeStruct((C_out, B_pad * HW), jnp.float32),
        grid_spec=grid_spec,
        compiler_params=pltpu.CompilerParams(
            dimension_semantics=("parallel",),
            vmem_limit_bytes=32 * 1024 * 1024),
    )(x, w1t, b1c, w23, b23, fc1t, fc2t)

    # Unfold: (C_out, B_pad*HW) -> (B, C_out, H, W), dropping batch padding.
    out = out.reshape(C_out, B_pad, HW)[:, :B]
    return jnp.transpose(out, (1, 0, 2)).reshape(B, C_out, H, W)


def reference(x_nchw, params):
    """Pure-JAX reference matching the PyTorch forward exactly."""
    x = jnp.transpose(x_nchw, (0, 2, 3, 1))                  # NHWC
    C_mid = params["w1"].shape[1]
    h = jnp.einsum("bhwc,cm->bhwm", x, params["w1"]) + params["b1"]
    w2 = params["w2"].reshape(3, 3, C_mid, C_mid)            # HWIO
    h = lax.conv_general_dilated(
        h, w2, window_strides=(1, 1), padding="SAME",
        dimension_numbers=("NHWC", "HWIO", "NHWC")) + params["b2"]
    h = jnp.einsum("bhwm,mo->bhwo", h, params["w3"]) + params["b3"]
    h = jnp.where(h >= 0.0, h, 0.2 * h)                      # LeakyReLU(0.2)
    y = jnp.mean(h, axis=(1, 2))                             # (B, C_out)
    z = jnp.maximum(y @ params["fc1"], 0.0)
    g = jax.nn.sigmoid(z @ params["fc2"])
    out = h * g[:, None, None, :]
    return jnp.transpose(out, (0, 3, 1, 2))


def make_params(key, in_channels, out_channels, reduction=8):
    mid = in_channels // reduction
    hid = out_channels // reduction
    ks = jax.random.split(key, 8)
    s = 0.1
    return {
        "w1": s * jax.random.normal(ks[0], (in_channels, mid), jnp.float32),
        "b1": s * jax.random.normal(ks[1], (1, mid), jnp.float32),
        "w2": s * jax.random.normal(ks[2], (9, mid, mid), jnp.float32),
        "b2": s * jax.random.normal(ks[3], (1, mid), jnp.float32),
        "w3": s * jax.random.normal(ks[4], (mid, out_channels), jnp.float32),
        "b3": s * jax.random.normal(ks[5], (1, out_channels), jnp.float32),
        "fc1": s * jax.random.normal(ks[6], (out_channels, hid), jnp.float32),
        "fc2": s * jax.random.normal(ks[7], (hid, out_channels), jnp.float32),
    }


if __name__ == "__main__":
    C_in, C_out, H, W = 32, 32, 16, 16
    key = jax.random.PRNGKey(0)
    kp, kx1, kx2 = jax.random.split(key, 3)
    params = make_params(kp, C_in, C_out, reduction=8)

    # B=2: one image per (parallel) grid step.  B=5: folded batch (BB=3, 2
    # steps) plus batch-padding path.
    for B, kx in ((2, kx1), (5, kx2)):
        x = jax.random.normal(kx, (B, C_in, H, W), jnp.float32)
        out = jax.block_until_ready(local_context_extractor(x, params))
        ref = jax.block_until_ready(reference(x, params))
        assert out.shape == (B, C_out, H, W)
        err = float(jnp.max(jnp.abs(out - ref)))
        assert jnp.allclose(out, ref, rtol=1e-3, atol=1e-3), (B, err)

    print("KERNEL_OK")
</pallas_src>

<mosaic_0001>
module attributes {stable_mosaic.version = 11 : i64} {
  func.func @kernel(%arg0: i32, %arg1: memref<32x256xf32, #tpu.memory_space<vmem>>, %arg2: memref<8x32xf32, #tpu.memory_space<vmem>>, %arg3: memref<8x1xf32, #tpu.memory_space<vmem>>, %arg4: memref<32x72xf32, #tpu.memory_space<vmem>>, %arg5: memref<32x1xf32, #tpu.memory_space<vmem>>, %arg6: memref<4x32xf32, #tpu.memory_space<vmem>>, %arg7: memref<32x4xf32, #tpu.memory_space<vmem>>, %arg8: memref<32x256xf32, #tpu.memory_space<vmem>>) attributes {dimension_semantics = [#tpu.dimension_semantics<parallel>], iteration_bounds = array<i64: 2>, scalar_prefetch = 0 : i64, scratch_operands = 0 : i64, tpu.core_type = #tpu.core_type<tc>, window_params = [{transform_indices = @transform_0, window_bounds = array<i64: 32, 256>}, {pipeline_mode = #tpu.pipeline_mode<synchronous>, transform_indices = @transform_1, window_bounds = array<i64: 8, 32>}, {pipeline_mode = #tpu.pipeline_mode<synchronous>, transform_indices = @transform_2, window_bounds = array<i64: 8, 1>}, {pipeline_mode = #tpu.pipeline_mode<synchronous>, transform_indices = @transform_3, window_bounds = array<i64: 32, 72>}, {pipeline_mode = #tpu.pipeline_mode<synchronous>, transform_indices = @transform_4, window_bounds = array<i64: 32, 1>}, {pipeline_mode = #tpu.pipeline_mode<synchronous>, transform_indices = @transform_5, window_bounds = array<i64: 4, 32>}, {pipeline_mode = #tpu.pipeline_mode<synchronous>, transform_indices = @transform_6, window_bounds = array<i64: 32, 4>}, {transform_indices = @transform_7, window_bounds = array<i64: 32, 256>}]} {
    %c0 = arith.constant 0 : index
    %c0_0 = arith.constant 0 : index
    %0 = vector.load %arg2[%c0, %c0_0] : memref<8x32xf32, #tpu.memory_space<vmem>>, vector<8x32xf32>
    %c0_1 = arith.constant 0 : index
    %c0_2 = arith.constant 0 : index
    %1 = vector.load %arg1[%c0_1, %c0_2] : memref<32x256xf32, #tpu.memory_space<vmem>>, vector<32x256xf32>
    %cst = arith.constant dense<0.000000e+00> : vector<8x256xf32>
    %2 = tpu.matmul %0, %1, %cst {dimension_numbers = #tpu.dot_dimension_numbers<[1], [0], [0], [1], [0, 0, 1, 1], [], []>} : vector<8x32xf32>, vector<32x256xf32>, vector<8x256xf32> -> vector<8x256xf32>
    %c0_3 = arith.constant 0 : index
    %c0_4 = arith.constant 0 : index
    %3 = vector.load %arg3[%c0_3, %c0_4] : memref<8x1xf32, #tpu.memory_space<vmem>>, vector<8x1xf32>
    %4 = vector.broadcast %3 : vector<8x1xf32> to vector<8x256xf32>
    %5 = arith.addf %2, %4 : vector<8x256xf32>
    %6 = tpu.iota {dimensions = array<i32: 1>} : vector<1x256xi32>
    %c256_i32 = arith.constant 256 : i32
    %c0_i32 = arith.constant 0 : i32
    %7 = arith.cmpi eq, %c256_i32, %c0_i32 : i32
    %c1_i32 = arith.constant 1 : i32
    %8 = arith.select %7, %c1_i32, %c256_i32 : i32
    %9 = vector.broadcast %8 : i32 to vector<1x256xi32>
    %10 = arith.remsi %6, %9 : vector<1x256xi32>
    %c0_i32_5 = arith.constant 0 : i32
    %11 = vector.broadcast %c0_i32_5 : i32 to vector<1x256xi32>
    %12 = arith.cmpi ne, %10, %11 : vector<1x256xi32>
    %c0_i32_6 = arith.constant 0 : i32
    %13 = vector.broadcast %c0_i32_6 : i32 to vector<1x256xi32>
    %14 = arith.cmpi slt, %10, %13 : vector<1x256xi32>
    %c0_i32_7 = arith.constant 0 : i32
    %15 = arith.cmpi slt, %8, %c0_i32_7 : i32
    %16 = vector.broadcast %15 : i1 to vector<1x256xi1>
    %17 = vector.broadcast %16 : vector<1x256xi1> to vector<1x256xi1>
    %18 = arith.xori %14, %17 : vector<1x256xi1>
    %19 = arith.andi %18, %12 : vector<1x256xi1>
    %20 = vector.broadcast %8 : i32 to vector<1x256xi32>
    %21 = arith.addi %10, %20 : vector<1x256xi32>
    %22 = arith.select %19, %21, %10 : vector<1x256xi1>, vector<1x256xi32>
    %c16_i32 = arith.constant 16 : i32
    %c0_i32_8 = arith.constant 0 : i32
    %23 = arith.cmpi eq, %c16_i32, %c0_i32_8 : i32
    %c1_i32_9 = arith.constant 1 : i32
    %24 = arith.select %23, %c1_i32_9, %c16_i32 : i32
    %25 = vector.broadcast %24 : i32 to vector<1x256xi32>
    %26 = arith.remsi %22, %25 : vector<1x256xi32>
    %c0_i32_10 = arith.constant 0 : i32
    %27 = vector.broadcast %c0_i32_10 : i32 to vector<1x256xi32>
    %28 = arith.cmpi ne, %26, %27 : vector<1x256xi32>
    %c0_i32_11 = arith.constant 0 : i32
    %29 = vector.broadcast %c0_i32_11 : i32 to vector<1x256xi32>
    %30 = arith.cmpi slt, %26, %29 : vector<1x256xi32>
    %c0_i32_12 = arith.constant 0 : i32
    %31 = arith.cmpi slt, %24, %c0_i32_12 : i32
    %32 = vector.broadcast %31 : i1 to vector<1x256xi1>
    %33 = vector.broadcast %32 : vector<1x256xi1> to vector<1x256xi1>
    %34 = arith.xori %30, %33 : vector<1x256xi1>
    %35 = arith.andi %34, %28 : vector<1x256xi1>
    %36 = vector.broadcast %24 : i32 to vector<1x256xi32>
    %37 = arith.addi %26, %36 : vector<1x256xi32>
    %38 = arith.select %35, %37, %26 : vector<1x256xi1>, vector<1x256xi32>
    %c17_i32 = arith.constant 17 : i32
    %39 = tpu.dynamic_rotate %5 by %c17_i32 dim 1 : vector<8x256xf32>, i32 -> vector<8x256xf32>
    %c16_i32_13 = arith.constant 16 : i32
    %40 = vector.broadcast %c16_i32_13 : i32 to vector<1x256xi32>
    %41 = arith.cmpi sge, %22, %40 : vector<1x256xi32>
    %c1_i32_14 = arith.constant 1 : i32
    %42 = vector.broadcast %c1_i32_14 : i32 to vector<1x256xi32>
    %43 = arith.cmpi sge, %38, %42 : vector<1x256xi32>
    %44 = arith.andi %41, %43 : vector<1x256xi1>
    %cst_15 = arith.constant 0.000000e+00 : f32
    %45 = vector.shape_cast %44 : vector<1x256xi1> to vector<1x256xi1>
    %46 = vector.broadcast %45 : vector<1x256xi1> to vector<8x256xi1>
    %47 = vector.broadcast %cst_15 : f32 to vector<8x256xf32>
    %48 = arith.select %46, %39, %47 : vector<8x256xi1>, vector<8x256xf32>
    %c16_i32_16 = arith.constant 16 : i32
    %49 = tpu.dynamic_rotate %5 by %c16_i32_16 dim 1 : vector<8x256xf32>, i32 -> vector<8x256xf32>
    %c16_i32_17 = arith.constant 16 : i32
    %50 = vector.broadcast %c16_i32_17 : i32 to vector<1x256xi32>
    %51 = arith.cmpi sge, %22, %50 : vector<1x256xi32>
    %cst_18 = arith.constant 0.000000e+00 : f32
    %52 = vector.shape_cast %51 : vector<1x256xi1> to vector<1x256xi1>
    %53 = vector.broadcast %52 : vector<1x256xi1> to vector<8x256xi1>
    %54 = vector.broadcast %cst_18 : f32 to vector<8x256xf32>
    %55 = arith.select %53, %49, %54 : vector<8x256xi1>, vector<8x256xf32>
    %c15_i32 = arith.constant 15 : i32
    %56 = tpu.dynamic_rotate %5 by %c15_i32 dim 1 : vector<8x256xf32>, i32 -> vector<8x256xf32>
    %c16_i32_19 = arith.constant 16 : i32
    %57 = vector.broadcast %c16_i32_19 : i32 to vector<1x256xi32>
    %58 = arith.cmpi sge, %22, %57 : vector<1x256xi32>
    %c15_i32_20 = arith.constant 15 : i32
    %59 = vector.broadcast %c15_i32_20 : i32 to vector<1x256xi32>
    %60 = arith.cmpi slt, %38, %59 : vector<1x256xi32>
    %61 = arith.andi %58, %60 : vector<1x256xi1>
    %cst_21 = arith.constant 0.000000e+00 : f32
    %62 = vector.shape_cast %61 : vector<1x256xi1> to vector<1x256xi1>
    %63 = vector.broadcast %62 : vector<1x256xi1> to vector<8x256xi1>
    %64 = vector.broadcast %cst_21 : f32 to vector<8x256xf32>
    %65 = arith.select %63, %56, %64 : vector<8x256xi1>, vector<8x256xf32>
    %c1_i32_22 = arith.constant 1 : i32
    %66 = tpu.dynamic_rotate %5 by %c1_i32_22 dim 1 : vector<8x256xf32>, i32 -> vector<8x256xf32>
    %c1_i32_23 = arith.constant 1 : i32
    %67 = vector.broadcast %c1_i32_23 : i32 to vector<1x256xi32>
    %68 = arith.cmpi sge, %38, %67 : vector<1x256xi32>
    %cst_24 = arith.constant 0.000000e+00 : f32
    %69 = vector.shape_cast %68 : vector<1x256xi1> to vector<1x256xi1>
    %70 = vector.broadcast %69 : vector<1x256xi1> to vector<8x256xi1>
    %71 = vector.broadcast %cst_24 : f32 to vector<8x256xf32>
    %72 = arith.select %70, %66, %71 : vector<8x256xi1>, vector<8x256xf32>
    %c255_i32 = arith.constant 255 : i32
    %73 = tpu.dynamic_rotate %5 by %c255_i32 dim 1 : vector<8x256xf32>, i32 -> vector<8x256xf32>
    %c15_i32_25 = arith.constant 15 : i32
    %74 = vector.broadcast %c15_i32_25 : i32 to vector<1x256xi32>
    %75 = arith.cmpi slt, %38, %74 : vector<1x256xi32>
    %cst_26 = arith.constant 0.000000e+00 : f32
    %76 = vector.shape_cast %75 : vector<1x256xi1> to vector<1x256xi1>
    %77 = vector.broadcast %76 : vector<1x256xi1> to vector<8x256xi1>
    %78 = vector.broadcast %cst_26 : f32 to vector<8x256xf32>
    %79 = arith.select %77, %73, %78 : vector<8x256xi1>, vector<8x256xf32>
    %c241_i32 = arith.constant 241 : i32
    %80 = tpu.dynamic_rotate %5 by %c241_i32 dim 1 : vector<8x256xf32>, i32 -> vector<8x256xf32>
    %c240_i32 = arith.constant 240 : i32
    %81 = vector.broadcast %c240_i32 : i32 to vector<1x256xi32>
    %82 = arith.cmpi slt, %22, %81 : vector<1x256xi32>
    %c1_i32_27 = arith.constant 1 : i32
    %83 = vector.broadcast %c1_i32_27 : i32 to vector<1x256xi32>
    %84 = arith.cmpi sge, %38, %83 : vector<1x256xi32>
    %85 = arith.andi %82, %84 : vector<1x256xi1>
    %cst_28 = arith.constant 0.000000e+00 : f32
    %86 = vector.shape_cast %85 : vector<1x256xi1> to vector<1x256xi1>
    %87 = vector.broadcast %86 : vector<1x256xi1> to vector<8x256xi1>
    %88 = vector.broadcast %cst_28 : f32 to vector<8x256xf32>
    %89 = arith.select %87, %80, %88 : vector<8x256xi1>, vector<8x256xf32>
    %c240_i32_29 = arith.constant 240 : i32
    %90 = tpu.dynamic_rotate %5 by %c240_i32_29 dim 1 : vector<8x256xf32>, i32 -> vector<8x256xf32>
    %c240_i32_30 = arith.constant 240 : i32
    %91 = vector.broadcast %c240_i32_30 : i32 to vector<1x256xi32>
    %92 = arith.cmpi slt, %22, %91 : vector<1x256xi32>
    %cst_31 = arith.constant 0.000000e+00 : f32
    %93 = vector.shape_cast %92 : vector<1x256xi1> to vector<1x256xi1>
    %94 = vector.broadcast %93 : vector<1x256xi1> to vector<8x256xi1>
    %95 = vector.broadcast %cst_31 : f32 to vector<8x256xf32>
    %96 = arith.select %94, %90, %95 : vector<8x256xi1>, vector<8x256xf32>
    %c239_i32 = arith.constant 239 : i32
    %97 = tpu.dynamic_rotate %5 by %c239_i32 dim 1 : vector<8x256xf32>, i32 -> vector<8x256xf32>
    %c240_i32_32 = arith.constant 240 : i32
    %98 = vector.broadcast %c240_i32_32 : i32 to vector<1x256xi32>
    %99 = arith.cmpi slt, %22, %98 : vector<1x256xi32>
    %c15_i32_33 = arith.constant 15 : i32
    %100 = vector.broadcast %c15_i32_33 : i32 to vector<1x256xi32>
    %101 = arith.cmpi slt, %38, %100 : vector<1x256xi32>
    %102 = arith.andi %99, %101 : vector<1x256xi1>
    %cst_34 = arith.constant 0.000000e+00 : f32
    %103 = vector.shape_cast %102 : vector<1x256xi1> to vector<1x256xi1>
    %104 = vector.broadcast %103 : vector<1x256xi1> to vector<8x256xi1>
    %105 = vector.broadcast %cst_34 : f32 to vector<8x256xf32>
    %106 = arith.select %104, %97, %105 : vector<8x256xi1>, vector<8x256xf32>
    %107 = tpu.concatenate %48, %55, %65, %72, %5, %79, %89, %96, %106 in 0 : vector<8x256xf32>, vector<8x256xf32>, vector<8x256xf32>, vector<8x256xf32>, vector<8x256xf32>, vector<8x256xf32>, vector<8x256xf32>, vector<8x256xf32>, vector<8x256xf32> -> vector<72x256xf32>
    %c0_35 = arith.constant 0 : index
    %c0_36 = arith.constant 0 : index
    %108 = vector.load %arg4[%c0_35, %c0_36] : memref<32x72xf32, #tpu.memory_space<vmem>>, vector<32x72xf32>
    %cst_37 = arith.constant dense<0.000000e+00> : vector<32x256xf32>
    %109 = tpu.matmul %108, %107, %cst_37 {dimension_numbers = #tpu.dot_dimension_numbers<[1], [0], [0], [1], [0, 0, 1, 1], [], []>} : vector<32x72xf32>, vector<72x256xf32>, vector<32x256xf32> -> vector<32x256xf32>
    %c0_38 = arith.constant 0 : index
    %c0_39 = arith.constant 0 : index
    %110 = vector.load %arg5[%c0_38, %c0_39] : memref<32x1xf32, #tpu.memory_space<vmem>>, vector<32x1xf32>
    %111 = vector.broadcast %110 : vector<32x1xf32> to vector<32x256xf32>
    %112 = arith.addf %109, %111 : vector<32x256xf32>
    %cst_40 = arith.constant 0.000000e+00 : f32
    %113 = vector.broadcast %cst_40 : f32 to vector<32x256xf32>
    %114 = arith.cmpf oge, %112, %113 : vector<32x256xf32>
    %cst_41 = arith.constant 2.000000e-01 : f32
    %115 = vector.broadcast %cst_41 : f32 to vector<32x256xf32>
    %116 = arith.mulf %115, %112 : vector<32x256xf32>
    %117 = arith.select %114, %112, %116 : vector<32x256xi1>, vector<32x256xf32>
    %cst_42 = arith.constant dense<0.000000e+00> : vector<32xf32>
    %118 = vector.multi_reduction <add>, %117, %cst_42 [1] : vector<32x256xf32> to vector<32xf32>
    %119 = vector.shape_cast %118 : vector<32xf32> to vector<32x1xf32>
    %cst_43 = arith.constant 3.906250e-03 : f32
    %120 = vector.broadcast %cst_43 : f32 to vector<32x1xf32>
    %121 = arith.mulf %119, %120 : vector<32x1xf32>
    %c0_44 = arith.constant 0 : index
    %c0_45 = arith.constant 0 : index
    %122 = vector.load %arg6[%c0_44, %c0_45] : memref<4x32xf32, #tpu.memory_space<vmem>>, vector<4x32xf32>
    %cst_46 = arith.constant dense<0.000000e+00> : vector<4x1xf32>
    %123 = tpu.matmul %122, %121, %cst_46 {dimension_numbers = #tpu.dot_dimension_numbers<[1], [0], [0], [1], [0, 0, 1, 1], [], []>} : vector<4x32xf32>, vector<32x1xf32>, vector<4x1xf32> -> vector<4x1xf32>
    %cst_47 = arith.constant 0.000000e+00 : f32
    %124 = vector.broadcast %cst_47 : f32 to vector<4x1xf32>
    %125 = arith.maximumf %123, %124 : vector<4x1xf32>
    %c0_48 = arith.constant 0 : index
    %c0_49 = arith.constant 0 : index
    %126 = vector.load %arg7[%c0_48, %c0_49] : memref<32x4xf32, #tpu.memory_space<vmem>>, vector<32x4xf32>
    %cst_50 = arith.constant dense<0.000000e+00> : vector<32x1xf32>
    %127 = tpu.matmul %126, %125, %cst_50 {dimension_numbers = #tpu.dot_dimension_numbers<[1], [0], [0], [1], [0, 0, 1, 1], [], []>} : vector<32x4xf32>, vector<4x1xf32>, vector<32x1xf32> -> vector<32x1xf32>
    %cst_51 = arith.constant 0.000000e+00 : f32
    %128 = vector.broadcast %cst_51 : f32 to vector<32x1xf32>
    %129 = arith.subf %128, %127 : vector<32x1xf32>
    %130 = math.exp %129 : vector<32x1xf32>
    %cst_52 = arith.constant 1.000000e+00 : f32
    %131 = vector.broadcast %cst_52 : f32 to vector<32x1xf32>
    %132 = arith.addf %131, %130 : vector<32x1xf32>
    %cst_53 = arith.constant 1.000000e+00 : f32
    %133 = vector.broadcast %cst_53 : f32 to vector<32x1xf32>
    %134 = arith.divf %133, %132 : vector<32x1xf32>
    %135 = vector.broadcast %134 : vector<32x1xf32> to vector<32x256xf32>
    %136 = arith.mulf %117, %135 : vector<32x256xf32>
    %c0_54 = arith.constant 0 : index
    %c0_55 = arith.constant 0 : index
    %137 = vector.load %arg8[%c0_54, %c0_55] : memref<32x256xf32, #tpu.memory_space<vmem>>, vector<32x256xf32>
    tpu.vector_store %arg8[%c0_54, %c0_55], %136 {strides = array<i32>} : memref<32x256xf32, #tpu.memory_space<vmem>>, vector<32x256xf32>,
    return
  }
  func.func @transform_0(%arg0: i32) -> (i32, i32) {
    %c0_i32 = arith.constant 0 : i32
    %c0_i32_0 = arith.constant 0 : i32
    return %c0_i32, %arg0 : i32, i32
  }
  func.func @transform_1(%arg0: i32) -> (i32, i32) {
    %c0_i32 = arith.constant 0 : i32
    %c0_i32_0 = arith.constant 0 : i32
    %c0_i32_1 = arith.constant 0 : i32
    return %c0_i32, %c0_i32_0 : i32, i32
  }
  func.func @transform_2(%arg0: i32) -> (i32, i32) {
    %c0_i32 = arith.constant 0 : i32
    %c0_i32_0 = arith.constant 0 : i32
    %c0_i32_1 = arith.constant 0 : i32
    return %c0_i32, %c0_i32_0 : i32, i32
  }
  func.func @transform_3(%arg0: i32) -> (i32, i32) {
    %c0_i32 = arith.constant 0 : i32
    %c0_i32_0 = arith.constant 0 : i32
    %c0_i32_1 = arith.constant 0 : i32
    return %c0_i32, %c0_i32_0 : i32, i32
  }
  func.func @transform_4(%arg0: i32) -> (i32, i32) {
    %c0_i32 = arith.constant 0 : i32
    %c0_i32_0 = arith.constant 0 : i32
    %c0_i32_1 = arith.constant 0 : i32
    return %c0_i32, %c0_i32_0 : i32, i32
  }
  func.func @transform_5(%arg0: i32) -> (i32, i32) {
    %c0_i32 = arith.constant 0 : i32
    %c0_i32_0 = arith.constant 0 : i32
    %c0_i32_1 = arith.constant 0 : i32
    return %c0_i32, %c0_i32_0 : i32, i32
  }
  func.func @transform_6(%arg0: i32) -> (i32, i32) {
    %c0_i32 = arith.constant 0 : i32
    %c0_i32_0 = arith.constant 0 : i32
    %c0_i32_1 = arith.constant 0 : i32
    return %c0_i32, %c0_i32_0 : i32, i32
  }
  func.func @transform_7(%arg0: i32) -> (i32, i32) {
    %c0_i32 = arith.constant 0 : i32
    %c0_i32_0 = arith.constant 0 : i32
    return %c0_i32, %arg0 : i32, i32
  }
}

</mosaic_0001>

<llo_original>
// kernel: tpu_custom_call.1
$region0: #{tpu_custom_call.1}
  #allocation0 [shape = 'u32[]', space=smem, size = 0x4, offset = 0x4, fixed_abs, tag = 'smem constant byte address 0x4 - core index']
  #allocation1 [shape = 'u32[72,128]{1,0:T(1,128)}', space=vmem, size = 0x9000, scoped, tag = 'internal scratch']
  %s0 = inlined_call_operand.hbm [shape: f32[32,512], index: 0, kind: input, shape index: {}]
  %s1 = inlined_call_operand.vmem [shape: f32[8,32], index: 1, kind: input, shape index: {}]
  %s2 = inlined_call_operand.vmem [shape: f32[8,1], index: 2, kind: input, shape index: {}]
  %s3 = inlined_call_operand.vmem [shape: f32[32,72], index: 3, kind: input, shape index: {}]
  %s4 = inlined_call_operand.vmem [shape: f32[32,1], index: 4, kind: input, shape index: {}]
  %s5 = inlined_call_operand.vmem [shape: f32[4,32], index: 5, kind: input, shape index: {}]
  %s6 = inlined_call_operand.vmem [shape: f32[32,4], index: 6, kind: input, shape index: {}]
  %s7 = inlined_call_operand.hbm [shape: f32[32,512], index: 7, kind: output, shape index: {}]
  %s8 = sld [smem:[#allocation0]]
  $region65: #{tpu_custom_call.1} parent=0
    _
  %s10 = ssub.s32 1, %s8
  %s11 = scalar_select 0, %s10, %s8
  $region1: #{tpu_custom_call.1} parent=0
    #allocation2 [shape = 'u8[65536]{0}', space=vmem, size = 0x10000, scoped, tag = 'input window, operand 0']
    #allocation3 [shape = 's32[2]{0}', space=sflag, size = 0x8, scoped, tag = 'scoped memory for tpu_custom_call.1']
    #allocation4 [shape = 's32[2]{0}', space=sflag, size = 0x8, scoped, tag = 'scoped memory for tpu_custom_call.1']
    #allocation5 [shape = 'u8[65536]{0}', space=vmem, size = 0x10000, scoped, tag = 'output window, operand 0']
    %12 = vsyncpa [#allocation3], 0
    %s13 = scalar_lea.sflag [#allocation3], 1
    %14 = vsyncpa %s13, 0
    %15 = vsyncpa [#allocation4], 0
    %s16 = scalar_lea.sflag [#allocation4], 1
    %17 = vsyncpa %s16, 0
    loop: start=0, step=1, limit=4
    $region2: #{tpu_custom_call.1} parent=1 // loop_pre_header
      _
    $region3: #{tpu_custom_call.1} parent=1 // loop_header
      %s19 = sphi 0, %s23
      %p20 = scmp.ge.s32.totalorder %s19, 4
      %s29 = sphi 0, %s31
      %s32 = sphi 0, %s29
      %s33 = sphi 0, %s32
      %s49 = sphi 0, %s33
      %s53 = sphi 0, %s53
      %s55 = sphi 0, %s53
      %s56 = sphi 0, %s55
      %s70 = sphi 0, %s56
      %s74 = sphi 0, %s74
      %s76 = sphi 0, %s74
      %s77 = sphi 0, %s76
      %s91 = sphi 0, %s77
      %s95 = sphi 0, %s95
      %s97 = sphi 0, %s95
      %s98 = sphi 0, %s97
      %s112 = sphi 0, %s98
      %s116 = sphi 0, %s116
      %s118 = sphi 0, %s116
      %s119 = sphi 0, %s118
      %s133 = sphi 0, %s119
      %s137 = sphi 0, %s137
      %s139 = sphi 0, %s137
      %s140 = sphi 0, %s139
      %s154 = sphi 0, %s140
      %s158 = sphi 0, %s158
      %s160 = sphi 0, %s158
      %s161 = sphi 0, %s160
      %s175 = sphi 0, %s161
      %s181 = sphi 0, %s183
      %s184 = sphi 0, %s181
      %s185 = sphi 0, %s184
      %s201 = sphi 0, %s185
    $region4: #{tpu_custom_call.1} parent=1 // loop_header_branch
      %22 = sbr.rel (%p20) target = $region8
    $region5: #{tpu_custom_call.1} parent=1 // loop_body
      %s24 = ssub.s32 %s19, 1
      %s25 = ssub.s32 %s19, 2
      %s26 = sadd.s32 %s19, 1
      %s27 = ssub.s32 %s19, %s26
      %p28 = scmp.eq.s32.totalorder %s27, 0
      %s30 = sadd.s32 %s29, 1
      %s31 = scalar_select %p28, %s29, %s30
      %p34 = pneg %p28
      %p35 = scmp.eq.s32.totalorder %s19, 1
      %p36 = por %p34, %p35
      %p37 = scmp.ne.s32.totalorder %s29, %s32
      %p38 = scmp.eq.s32.totalorder %s19, 0
      %p39 = por %p37, %p38
      %p40 = scmp.ne.s32.totalorder %s29, %s32
      %p41 = scmp.eq.s32.totalorder %s24, 1
      %p42 = por %p40, %p41
      %p43 = scmp.ne.s32.totalorder %s32, %s33
      %p44 = scmp.eq.s32.totalorder %s24, 0
      %p45 = por %p43, %p44
      %p46 = scmp.ne.s32.totalorder %s32, %s33
      %p47 = scmp.eq.s32.totalorder %s25, 1
      %p48 = por %p46, %p47
      %p50 = scmp.ne.s32.totalorder %s33, %s49
      %p51 = scmp.eq.s32.totalorder %s25, 0
      %p52 = por %p50, %p51
      %s54 = sadd.s32 %s53, 1
      %p57 = scmp.eq.s32.totalorder %s19, 1
      %p58 = scmp.ne.s32.totalorder %s53, %s55
      %p59 = scmp.eq.s32.totalorder %s19, 0
      %p60 = por %p58, %p59
      %p61 = scmp.ne.s32.totalorder %s53, %s55
      %p62 = scmp.eq.s32.totalorder %s24, 1
      %p63 = por %p61, %p62
      %p64 = scmp.ne.s32.totalorder %s55, %s56
      %p65 = scmp.eq.s32.totalorder %s24, 0
      %p66 = por %p64, %p65
      %p67 = scmp.ne.s32.totalorder %s55, %s56
      %p68 = scmp.eq.s32.totalorder %s25, 1
      %p69 = por %p67, %p68
      %p71 = scmp.ne.s32.totalorder %s56, %s70
      %p72 = scmp.eq.s32.totalorder %s25, 0
      %p73 = por %p71, %p72
      %s75 = sadd.s32 %s74, 1
      %p78 = scmp.eq.s32.totalorder %s19, 1
      %p79 = scmp.ne.s32.totalorder %s74, %s76
      %p80 = scmp.eq.s32.totalorder %s19, 0
      %p81 = por %p79, %p80
      %p82 = scmp.ne.s32.totalorder %s74, %s76
      %p83 = scmp.eq.s32.totalorder %s24, 1
      %p84 = por %p82, %p83
      %p85 = scmp.ne.s32.totalorder %s76, %s77
      %p86 = scmp.eq.s32.totalorder %s24, 0
      %p87 = por %p85, %p86
      %p88 = scmp.ne.s32.totalorder %s76, %s77
      %p89 = scmp.eq.s32.totalorder %s25, 1
      %p90 = por %p88, %p89
      %p92 = scmp.ne.s32.totalorder %s77, %s91
      %p93 = scmp.eq.s32.totalorder %s25, 0
      %p94 = por %p92, %p93
      %s96 = sadd.s32 %s95, 1
      %p99 = scmp.eq.s32.totalorder %s19, 1
      %p100 = scmp.ne.s32.totalorder %s95, %s97
      %p101 = scmp.eq.s32.totalorder %s19, 0
      %p102 = por %p100, %p101
      %p103 = scmp.ne.s32.totalorder %s95, %s97
      %p104 = scmp.eq.s32.totalorder %s24, 1
      %p105 = por %p103, %p104
      %p106 = scmp.ne.s32.totalorder %s97, %s98
      %p107 = scmp.eq.s32.totalorder %s24, 0
      %p108 = por %p106, %p107
      %p109 = scmp.ne.s32.totalorder %s97, %s98
      %p110 = scmp.eq.s32.totalorder %s25, 1
      %p111 = por %p109, %p110
      %p113 = scmp.ne.s32.totalorder %s98, %s112
      %p114 = scmp.eq.s32.totalorder %s25, 0
      %p115 = por %p113, %p114
      %s117 = sadd.s32 %s116, 1
      %p120 = scmp.eq.s32.totalorder %s19, 1
      %p121 = scmp.ne.s32.totalorder %s116, %s118
      %p122 = scmp.eq.s32.totalorder %s19, 0
      %p123 = por %p121, %p122
      %p124 = scmp.ne.s32.totalorder %s116, %s118
      %p125 = scmp.eq.s32.totalorder %s24, 1
      %p126 = por %p124, %p125
      %p127 = scmp.ne.s32.totalorder %s118, %s119
      %p128 = scmp.eq.s32.totalorder %s24, 0
      %p129 = por %p127, %p128
      %p130 = scmp.ne.s32.totalorder %s118, %s119
      %p131 = scmp.eq.s32.totalorder %s25, 1
      %p132 = por %p130, %p131
      %p134 = scmp.ne.s32.totalorder %s119, %s133
      %p135 = scmp.eq.s32.totalorder %s25, 0
      %p136 = por %p134, %p135
      %s138 = sadd.s32 %s137, 1
      %p141 = scmp.eq.s32.totalorder %s19, 1
      %p142 = scmp.ne.s32.totalorder %s137, %s139
      %p143 = scmp.eq.s32.totalorder %s19, 0
      %p144 = por %p142, %p143
      %p145 = scmp.ne.s32.totalorder %s137, %s139
      %p146 = scmp.eq.s32.totalorder %s24, 1
      %p147 = por %p145, %p146
      %p148 = scmp.ne.s32.totalorder %s139, %s140
      %p149 = scmp.eq.s32.totalorder %s24, 0
      %p150 = por %p148, %p149
      %p151 = scmp.ne.s32.totalorder %s139, %s140
      %p152 = scmp.eq.s32.totalorder %s25, 1
      %p153 = por %p151, %p152
      %p155 = scmp.ne.s32.totalorder %s140, %s154
      %p156 = scmp.eq.s32.totalorder %s25, 0
      %p157 = por %p155, %p156
      %s159 = sadd.s32 %s158, 1
      %p162 = scmp.eq.s32.totalorder %s19, 1
      %p163 = scmp.ne.s32.totalorder %s158, %s160
      %p164 = scmp.eq.s32.totalorder %s19, 0
      %p165 = por %p163, %p164
      %p166 = scmp.ne.s32.totalorder %s158, %s160
      %p167 = scmp.eq.s32.totalorder %s24, 1
      %p168 = por %p166, %p167
      %p169 = scmp.ne.s32.totalorder %s160, %s161
      %p170 = scmp.eq.s32.totalorder %s24, 0
      %p171 = por %p169, %p170
      %p172 = scmp.ne.s32.totalorder %s160, %s161
      %p173 = scmp.eq.s32.totalorder %s25, 1
      %p174 = por %p172, %p173
      %p176 = scmp.ne.s32.totalorder %s161, %s175
      %p177 = scmp.eq.s32.totalorder %s25, 0
      %p178 = por %p176, %p177
      %s179 = ssub.s32 %s19, %s26
      %p180 = scmp.eq.s32.totalorder %s179, 0
      %s182 = sadd.s32 %s181, 1
      %s183 = scalar_select %p180, %s181, %s182
      %p186 = pneg %p180
      %p187 = scmp.eq.s32.totalorder %s19, 1
      %p188 = por %p186, %p187
      %p189 = scmp.ne.s32.totalorder %s181, %s184
      %p190 = scmp.eq.s32.totalorder %s19, 0
      %p191 = por %p189, %p190
      %p192 = scmp.ne.s32.totalorder %s181, %s184
      %p193 = scmp.eq.s32.totalorder %s24, 1
      %p194 = por %p192, %p193
      %p195 = scmp.ne.s32.totalorder %s184, %s185
      %p196 = scmp.eq.s32.totalorder %s24, 0
      %p197 = por %p195, %p196
      %p198 = scmp.ne.s32.totalorder %s184, %s185
      %p199 = scmp.eq.s32.totalorder %s25, 1
      %p200 = por %p198, %p199
      %p202 = scmp.ne.s32.totalorder %s185, %s201
      %p203 = scmp.eq.s32.totalorder %s25, 0
      %p204 = por %p202, %p203
      %p205 = scmp.le.s32.totalorder 1, %s19
      %p206 = scmp.lt.s32.totalorder %s19, 3
      %p207 = pnand %p205, %p206
      %p208 = pneg %p207
      // Predicated region
      $region9: #{tpu_custom_call.1} parent=5 // pred_check
        _
      $region10: #{tpu_custom_call.1} parent=5 // pred_check_branch
        %210 = sbr.rel (%p207) target = $region12
      $region11: #{tpu_custom_call.1} parent=5 // pred_region
        %s211 = ssub.s32 %s19, 1
        // Predicated region
        $region13: #{tpu_custom_call.1} parent=11 // pred_check
          %p212 = pneg %p66
        $region14: #{tpu_custom_call.1} parent=11 // pred_check_branch
          %214 = sbr.rel (%p212) target = $region16
        $region15: #{tpu_custom_call.1} parent=11 // pred_region
          _
        $region16: #{tpu_custom_call.1} parent=11 // pred_fallthru
          _
        // Predicated region
        $region17: #{tpu_custom_call.1} parent=11 // pred_check
          %p215 = pneg %p87
        $region18: #{tpu_custom_call.1} parent=11 // pred_check_branch
          %217 = sbr.rel (%p215) target = $region20
        $region19: #{tpu_custom_call.1} parent=11 // pred_region
          _
        $region20: #{tpu_custom_call.1} parent=11 // pred_fallthru
          _
        // Predicated region
        $region21: #{tpu_custom_call.1} parent=11 // pred_check
          %p218 = pneg %p108
        $region22: #{tpu_custom_call.1} parent=11 // pred_check_branch
          %220 = sbr.rel (%p218) target = $region24
        $region23: #{tpu_custom_call.1} parent=11 // pred_region
          _
        $region24: #{tpu_custom_call.1} parent=11 // pred_fallthru
          _
        // Predicated region
        $region25: #{tpu_custom_call.1} parent=11 // pred_check
          %p221 = pneg %p129
        $region26: #{tpu_custom_call.1} parent=11 // pred_check_branch
          %223 = sbr.rel (%p221) target = $region28
        $region27: #{tpu_custom_call.1} parent=11 // pred_region
          _
        $region28: #{tpu_custom_call.1} parent=11 // pred_fallthru
          _
        // Predicated region
        $region29: #{tpu_custom_call.1} parent=11 // pred_check
          %p224 = pneg %p150
        $region30: #{tpu_custom_call.1} parent=11 // pred_check_branch
          %226 = sbr.rel (%p224) target = $region32
        $region31: #{tpu_custom_call.1} parent=11 // pred_region
          _
        $region32: #{tpu_custom_call.1} parent=11 // pred_fallthru
          _
        // Predicated region
        $region33: #{tpu_custom_call.1} parent=11 // pred_check
          %p227 = pneg %p171
        $region34: #{tpu_custom_call.1} parent=11 // pred_check_branch
          %229 = sbr.rel (%p227) target = $region36
        $region35: #{tpu_custom_call.1} parent=11 // pred_region
          _
        $region36: #{tpu_custom_call.1} parent=11 // pred_fallthru
          _
      $region12: #{tpu_custom_call.1} parent=5 // pred_fallthru
        _
      %p230 = scmp.lt.s32.totalorder %s19, 2
      // Predicated region
      $region37: #{tpu_custom_call.1} parent=5 // pred_check
        %p231 = pneg %p230
      $region38: #{tpu_custom_call.1} parent=5 // pred_check_branch
        %233 = sbr.rel (%p231) target = $region40
      $region39: #{tpu_custom_call.1} parent=5 // pred_region
        // Predicated region
        $region41: #{tpu_custom_call.1} parent=39 // pred_check
          %p234 = pneg %p39
        $region42: #{tpu_custom_call.1} parent=39 // pred_check_branch
          %236 = sbr.rel (%p234) target = $region44
        $region43: #{tpu_custom_call.1} parent=39 // pred_region
          %s237 = sand.u32 %s29, 1
          %s238 = scalar_lea.sflag [#allocation3], %s237
          %s239 = sand.u32 %s29, 1
          %s240 = smul.addr %s239, 64
          %s241 = scalar_lea.vmem [#allocation2], %s240
          %s242 = smul.u32 2, %s19
          %244 = vsyncadd %s238, 0
          %s245 = smul.addr %s242, 8
          %s246 = scalar_lea.hbm %s0, %s245
          %s247 = sshll.u32 %s246, 4
          %s248 = int_to_ptr.hbm [resolvable:$true] %s247
          %s249 = sshll.u32 %s241, 4
          %s250 = int_to_ptr.vmem [resolvable:$true] %s249
          %255 = dma.hbm_to_vmem [thread:$0]  %s248, 1024, %s250, %s238, 512, 256, 16
        $region44: #{tpu_custom_call.1} parent=39 // pred_fallthru
          _
      $region40: #{tpu_custom_call.1} parent=5 // pred_fallthru
        _
      %p256 = scmp.le.s32.totalorder 1, %s19
      %p257 = scmp.lt.s32.totalorder %s19, 3
      %p258 = pnand %p256, %p257
      %p259 = pneg %p258
      // Predicated region
      $region45: #{tpu_custom_call.1} parent=5 // pred_check
        _
      $region46: #{tpu_custom_call.1} parent=5 // pred_check_branch
        %261 = sbr.rel (%p258) target = $region48
      $region47: #{tpu_custom_call.1} parent=5 // pred_region
        %s262 = ssub.s32 %s19, 1
        %s263 = sand.u32 %s32, 1
        %s264 = scalar_lea.sflag [#allocation3], %s263
        %s265 = sand.u32 %s32, 1
        %s266 = smul.addr %s265, 64
        %s267 = scalar_lea.vmem [#allocation2], %s266
        // Predicated region
        $region49: #{tpu_custom_call.1} parent=47 // pred_check
          %p268 = pneg %p45
        $region50: #{tpu_custom_call.1} parent=47 // pred_check_branch
          %270 = sbr.rel (%p268) target = $region52
        $region51: #{tpu_custom_call.1} parent=47 // pred_region
          %272 = dma.done %s264, 1024
        $region52: #{tpu_custom_call.1} parent=47 // pred_fallthru
          _
        %s273 = sand.u32 %s32, 1
        %s274 = scalar_lea.sflag [#allocation3], %s273
        %s275 = sand.u32 %s32, 1
        %s276 = smul.addr %s275, 64
        %s277 = scalar_lea.vmem [#allocation2], %s276
        %p278 = pneg %p45
        %p279 = pneg %p42
        %p280 = pneg %p66
        %p281 = pneg %p63
        %p282 = pneg %p87
        %p283 = pneg %p84
        %p284 = pneg %p108
        %p285 = pneg %p105
        %p286 = pneg %p129
        %p287 = pneg %p126
        %p288 = pneg %p150
        %p289 = pneg %p147
        %p290 = pneg %p171
        %p291 = pneg %p168
        %p292 = pneg %p197
        %p293 = pneg %p194
        %s294 = sand.u32 %s184, 1
        %s295 = scalar_lea.sflag [#allocation4], %s294
        %s296 = sand.u32 %s184, 1
        %s297 = smul.addr %s296, 64
        %s298 = scalar_lea.vmem [#allocation5], %s297
        %s299 = smul.u32 2, %s24
        %s300 = smul.u32 2, %s24
        %v301 = vld [vmem:[%s1] sm:$0xff]
        %v302 = vld [vmem:[%s267] sm:$0xff]
        %v303 = vld [vmem:[%s267 + $0x8] sm:$0xff]
        %v304 = vld [vmem:[%s267 + $0x10] sm:$0xff]
        %v305 = vld [vmem:[%s267 + $0x18] sm:$0xff]
        %v306 = vld [vmem:[%s267 + $0x20] sm:$0xff]
        %v307 = vld [vmem:[%s267 + $0x28] sm:$0xff]
        %v308 = vld [vmem:[%s267 + $0x30] sm:$0xff]
        %v309 = vld [vmem:[%s267 + $0x38] sm:$0xff]
        %v310 = vld [vmem:[%s2] sm:$0xff]
        %312 = vset.pattern.permute.xlu0 0
        %313 = vperm.xlu0 %312, %v310
        %v314 = vpop.permute.xlu0 %313
        %vm316 = vcmask 261120
        %v318 = vsel %vm316, %v301, 0
        %320 = vmatpush.msra.mxu0 0.0
        %321 = vmatpush.msra.mxu0 0.0
        %322 = vmatpush.msra.mxu0 0.0
        %323 = vmatpush.msra.mxu0 0.0
        %324 = vmatpush.msra.mxu0 0.0
        %325 = vmatpush.msra.mxu0 0.0
        %326 = vmatpush.msra.mxu0 0.0
        %327 = vmatpush.msra.mxu0 0.0
        %328 = vmatpush.msra.mxu0 0.0
        %329 = vmatpush.msra.mxu0 0.0
        %330 = vmatpush.msra.mxu0 0.0
        %331 = vmatpush.msra.mxu0 0.0
        %332 = vmatpush.msra.mxu0 %v308
        %333 = vmatpush.msra.mxu0 %v306
        %334 = vmatpush.msra.mxu0 %v304
        %335 = vmatpush.msra.mxu0 %v302
        %336 = vmatmul.f32.gmra.mxu0 %v318
        %v337 = vpop.f32.mrf.mxu0
        %v338 = vadd.f32 %v314, %v337
        %339 = vdwg.mxu0
        %340 = vmatpush.msra.mxu0 0.0
        %341 = vmatpush.msra.mxu0 0.0
        %342 = vmatpush.msra.mxu0 0.0
        %343 = vmatpush.msra.mxu0 0.0
        %344 = vmatpush.msra.mxu0 0.0
        %345 = vmatpush.msra.mxu0 0.0
        %346 = vmatpush.msra.mxu0 0.0
        %347 = vmatpush.msra.mxu0 0.0
        %348 = vmatpush.msra.mxu0 0.0
        %349 = vmatpush.msra.mxu0 0.0
        %350 = vmatpush.msra.mxu0 0.0
        %351 = vmatpush.msra.mxu0 0.0
        %352 = vmatpush.msra.mxu0 %v309
        %353 = vmatpush.msra.mxu0 %v307
        %354 = vmatpush.msra.mxu0 %v305
        %355 = vmatpush.msra.mxu0 %v303
        %356 = vmatmul.f32.gmra.mxu0 %v318
        %v357 = vpop.f32.mrf.mxu0
        %v358 = vadd.f32 %v314, %v357
        %359 = vdwg.mxu0
        %v360 = vlaneseq
        %v361 = vand.u32 %v360, 127
        %v362 = vadd.s32 %v361, 128
        %vm363 = vcmp.lt.s32.totalorder %v361, 0
        %v364 = vsub.s32 0, %v361
        %v365 = vsel %vm363, %v364, %v361
        %v366 = vshrl.u32 %v365, 8
        %v367 = vand.u32 %v365, 255
        %v368 = vsub.s32 0, %v367
        %v369 = vsel %vm363, %v368, %v367
        %vm370 = vcmp.lt.s32.totalorder %v362, 0
        %v371 = vsub.s32 0, %v362
        %v372 = vsel %vm370, %v371, %v362
        %v373 = vshrl.u32 %v372, 8
        %v374 = vand.u32 %v372, 255
        %v375 = vsub.s32 0, %v374
        %v376 = vsel %vm370, %v375, %v374
        %vm377 = vcmp.ne.s32.totalorder %v369, 0
        %vm378 = vcmp.ne.s32.totalorder %v376, 0
        %vm379 = vcmp.lt.s32.totalorder %v369, 0
        %vm380 = vcmp.lt.s32.totalorder %v376, 0
        %vm381 = vmand %vm379, %vm377
        %vm382 = vmand %vm380, %vm378
        %v383 = vadd.s32 %v369, 256
        %v384 = vadd.s32 %v376, 256
        %v385 = vsel %vm381, %v383, %v369
        %v386 = vsel %vm382, %v384, %v376
        %vm387 = vcmp.lt.s32.totalorder %v385, 0
        %v388 = vsub.s32 0, %v385
        %v389 = vsel %vm387, %v388, %v385
        %v390 = vshrl.u32 %v389, 4
        %v391 = vand.u32 %v389, 15
        %v392 = vsub.s32 0, %v391
        %v393 = vsel %vm387, %v392, %v391
        %vm394 = vcmp.lt.s32.totalorder %v386, 0
        %v395 = vsub.s32 0, %v386
        %v396 = vsel %vm394, %v395, %v386
        %v397 = vshrl.u32 %v396, 4
        %v398 = vand.u32 %v396, 15
        %v399 = vsub.s32 0, %v398
        %v400 = vsel %vm394, %v399, %v398
        %vm401 = vcmp.ne.s32.totalorder %v393, 0
        %vm402 = vcmp.ne.s32.totalorder %v400, 0
        %vm403 = vcmp.lt.s32.totalorder %v393, 0
        %vm404 = vcmp.lt.s32.totalorder %v400, 0
        %vm405 = vmand %vm403, %vm401
        %vm406 = vmand %vm404, %vm402
        %v407 = vadd.s32 %v393, 16
        %v408 = vadd.s32 %v400, 16
        %v409 = vsel %vm405, %v407, %v393
        %v410 = vsel %vm406, %v408, %v400
        %411 = vrot.lane.b32.xlu0 %v338, 17
        %v412 = vpop.permute.xlu0 %411
        %413 = vrot.lane.b32.xlu0 %v358, 17
        %v414 = vpop.permute.xlu0 %413
        %vm415 = vcmp.lt.s32.totalorder %v361, 17
        %v416 = vsel %vm415, %v412, %v414
        %v417 = vsel %vm415, %v414, %v412
        %vm418 = vcmp.ge.s32.totalorder %v385, 16
        %vm419 = vcmp.ge.s32.totalorder %v386, 16
        %vm420 = vcmp.ge.s32.totalorder %v409, 1
        %vm421 = vcmp.ge.s32.totalorder %v410, 1
        %vm422 = vmand %vm418, %vm420
        %vm423 = vmand %vm419, %vm421
        %v424 = vsel %vm422, 1, 0
        %v425 = vsel %vm423, 1, 0
        %vm426 = vcmp.eq.s32.totalorder %v424, 1
        %vm427 = vcmp.eq.s32.totalorder %v425, 1
        %v428 = vsel %vm426, %v417, 0.0
        %v429 = vsel %vm427, %v416, 0.0
        %430 = vrot.lane.b32.xlu0 %v338, 16
        %v431 = vpop.permute.xlu0 %430
        %432 = vrot.lane.b32.xlu0 %v358, 16
        %v433 = vpop.permute.xlu0 %432
        %vm434 = vcmp.lt.s32.totalorder %v361, 16
        %v435 = vsel %vm434, %v431, %v433
        %v436 = vsel %vm434, %v433, %v431
        %v437 = vsel %vm418, 1, 0
        %v438 = vsel %vm419, 1, 0
        %vm439 = vcmp.eq.s32.totalorder %v437, 1
        %vm440 = vcmp.eq.s32.totalorder %v438, 1
        %v441 = vsel %vm439, %v436, 0.0
        %v442 = vsel %vm440, %v435, 0.0
        %443 = vrot.lane.b32.xlu0 %v338, 15
        %v444 = vpop.permute.xlu0 %443
        %445 = vrot.lane.b32.xlu0 %v358, 15
        %v446 = vpop.permute.xlu0 %445
        %vm447 = vcmp.lt.s32.totalorder %v361, 15
        %v448 = vsel %vm447, %v444, %v446
        %v449 = vsel %vm447, %v446, %v444
        %vm450 = vcmp.lt.s32.totalorder %v409, 15
        %vm451 = vcmp.lt.s32.totalorder %v410, 15
        %vm452 = vmand %vm418, %vm450
        %vm453 = vmand %vm419, %vm451
        %v454 = vsel %vm452, 1, 0
        %v455 = vsel %vm453, 1, 0
        %vm456 = vcmp.eq.s32.totalorder %v454, 1
        %vm457 = vcmp.eq.s32.totalorder %v455, 1
        %v458 = vsel %vm456, %v449, 0.0
        %v459 = vsel %vm457, %v448, 0.0
        %460 = vrot.lane.b32.xlu0 %v338, 1
        %v461 = vpop.permute.xlu0 %460
        %462 = vrot.lane.b32.xlu0 %v358, 1
        %v463 = vpop.permute.xlu0 %462
        %vm464 = vcmp.lt.s32.totalorder %v361, 1
        %v465 = vsel %vm464, %v461, %v463
        %v466 = vsel %vm464, %v463, %v461
        %v467 = vsel %vm420, 1, 0
        %v468 = vsel %vm421, 1, 0
        %vm469 = vcmp.eq.s32.totalorder %v467, 1
        %vm470 = vcmp.eq.s32.totalorder %v468, 1
        %v471 = vsel %vm469, %v466, 0.0
        %v472 = vsel %vm470, %v465, 0.0
        %473 = vrot.lane.b32.xlu0 %v338, 127
        %v474 = vpop.permute.xlu0 %473
        %475 = vrot.lane.b32.xlu0 %v358, 127
        %v476 = vpop.permute.xlu0 %475
        %vm477 = vcmp.lt.s32.totalorder %v361, 127
        %v478 = vsel %vm477, %v474, %v476
        %v479 = vsel %vm477, %v476, %v474
        %v480 = vsel %vm450, 1, 0
        %v481 = vsel %vm451, 1, 0
        %vm482 = vcmp.eq.s32.totalorder %v480, 1
        %vm483 = vcmp.eq.s32.totalorder %v481, 1
        %v484 = vsel %vm482, %v478, 0.0
        %v485 = vsel %vm483, %v479, 0.0
        %486 = vrot.lane.b32.xlu0 %v338, 113
        %v487 = vpop.permute.xlu0 %486
        %488 = vrot.lane.b32.xlu0 %v358, 113
        %v489 = vpop.permute.xlu0 %488
        %vm490 = vcmp.lt.s32.totalorder %v361, 113
        %v491 = vsel %vm490, %v487, %v489
        %v492 = vsel %vm490, %v489, %v487
        %vm493 = vcmp.lt.s32.totalorder %v385, 240
        %vm494 = vcmp.lt.s32.totalorder %v386, 240
        %vm495 = vmand %vm493, %vm420
        %vm496 = vmand %vm494, %vm421
        %v497 = vsel %vm495, 1, 0
        %v498 = vsel %vm496, 1, 0
        %vm499 = vcmp.eq.s32.totalorder %v497, 1
        %vm500 = vcmp.eq.s32.totalorder %v498, 1
        %v501 = vsel %vm499, %v491, 0.0
        %v502 = vsel %vm500, %v492, 0.0
        %503 = vrot.lane.b32.xlu0 %v338, 112
        %v504 = vpop.permute.xlu0 %503
        %505 = vrot.lane.b32.xlu0 %v358, 112
        %v506 = vpop.permute.xlu0 %505
        %vm507 = vcmp.lt.s32.totalorder %v361, 112
        %v508 = vsel %vm507, %v504, %v506
        %v509 = vsel %vm507, %v506, %v504
        %v510 = vsel %vm493, 1, 0
        %v511 = vsel %vm494, 1, 0
        %vm512 = vcmp.eq.s32.totalorder %v510, 1
        %vm513 = vcmp.eq.s32.totalorder %v511, 1
        %v514 = vsel %vm512, %v508, 0.0
        %v515 = vsel %vm513, %v509, 0.0
        %516 = vrot.lane.b32.xlu0 %v338, 111
        %v517 = vpop.permute.xlu0 %516
        %518 = vrot.lane.b32.xlu0 %v358, 111
        %v519 = vpop.permute.xlu0 %518
        %vm520 = vcmp.lt.s32.totalorder %v361, 111
        %v521 = vsel %vm520, %v517, %v519
        %v522 = vsel %vm520, %v519, %v517
        %vm523 = vmand %vm493, %vm450
        %vm524 = vmand %vm494, %vm451
        %v525 = vsel %vm523, 1, 0
        %v526 = vsel %vm524, 1, 0
        %vm527 = vcmp.eq.s32.totalorder %v525, 1
        %vm528 = vcmp.eq.s32.totalorder %v526, 1
        %v529 = vsel %vm527, %v521, 0.0
        %v530 = vsel %vm528, %v522, 0.0
        %v531 = vld [vmem:[%s3] sm:$0xff]
        %v532 = vld [vmem:[%s3 + $0x8] sm:$0xff]
        %v533 = vld [vmem:[%s3 + $0x10] sm:$0xff]
        %v534 = vld [vmem:[%s3 + $0x18] sm:$0xff]
        %v535 = vld [vmem:[%s4] sm:$0xff]
        %v536 = vld [vmem:[%s4 + $0x8] sm:$0xff]
        %v537 = vld [vmem:[%s4 + $0x10] sm:$0xff]
        %v538 = vld [vmem:[%s4 + $0x18] sm:$0xff]
        %540 = vset.pattern.permute.xlu0 0
        %541 = vperm.xlu0 %540, %v535
        %v542 = vpop.permute.xlu0 %541
        %545 = vset.pattern.permute.xlu0 0
        %546 = vperm.xlu0 %545, %v536
        %v547 = vpop.permute.xlu0 %546
        %550 = vset.pattern.permute.xlu0 0
        %551 = vperm.xlu0 %550, %v537
        %v552 = vpop.permute.xlu0 %551
        %555 = vset.pattern.permute.xlu0 0
        %556 = vperm.xlu0 %555, %v538
        %v557 = vpop.permute.xlu0 %556
        %vm559 = vcmask 588800
        %v561 = vsel %vm559, %v531, 0
        %v564 = vsel %vm559, %v532, 0
        %v567 = vsel %vm559, %v533, 0
        %v570 = vsel %vm559, %v534, 0
        %572 = vmatpush.msra.mxu0 0.0
        %573 = vmatpush.msra.mxu0 0.0
        %574 = vmatpush.msra.mxu0 0.0
        %575 = vmatpush.msra.mxu0 0.0
        %576 = vmatpush.msra.mxu0 0.0
        %577 = vmatpush.msra.mxu0 0.0
        %578 = vmatpush.msra.mxu0 0.0
        %579 = vmatpush.msra.mxu0 %v529
        %580 = vmatpush.msra.mxu0 %v514
        %581 = vmatpush.msra.mxu0 %v501
        %582 = vmatpush.msra.mxu0 %v484
        %583 = vmatpush.msra.mxu0 %v338
        %584 = vmatpush.msra.mxu0 %v471
        %585 = vmatpush.msra.mxu0 %v458
        %586 = vmatpush.msra.mxu0 %v441
        %587 = vmatpush.msra.mxu0 %v428
        %588 = vmatmul.f32.gmra.mxu0 %v561
        %v589 = vpop.f32.mrf.mxu0
        %v590 = vadd.f32 %v542, %v589
        %591 = vmatmul.f32.gmra.mxu0 %v564
        %v592 = vpop.f32.mrf.mxu0
        %v593 = vadd.f32 %v547, %v592
        %594 = vmatmul.f32.gmra.mxu0 %v567
        %v595 = vpop.f32.mrf.mxu0
        %v596 = vadd.f32 %v552, %v595
        %597 = vmatmul.f32.gmra.mxu0 %v570
        %v598 = vpop.f32.mrf.mxu0
        %v599 = vadd.f32 %v557, %v598
        %600 = vdwg.mxu0
        %601 = vmatpush.msra.mxu0 0.0
        %602 = vmatpush.msra.mxu0 0.0
        %603 = vmatpush.msra.mxu0 0.0
        %604 = vmatpush.msra.mxu0 0.0
        %605 = vmatpush.msra.mxu0 0.0
        %606 = vmatpush.msra.mxu0 0.0
        %607 = vmatpush.msra.mxu0 0.0
        %608 = vmatpush.msra.mxu0 %v530
        %609 = vmatpush.msra.mxu0 %v515
        %610 = vmatpush.msra.mxu0 %v502
        %611 = vmatpush.msra.mxu0 %v485
        %612 = vmatpush.msra.mxu0 %v358
        %613 = vmatpush.msra.mxu0 %v472
        %614 = vmatpush.msra.mxu0 %v459
        %615 = vmatpush.msra.mxu0 %v442
        %616 = vmatpush.msra.mxu0 %v429
        %617 = vmatmul.f32.gmra.mxu0 %v561
        %v618 = vpop.f32.mrf.mxu0
        %v619 = vadd.f32 %v542, %v618
        %620 = vmatmul.f32.gmra.mxu0 %v564
        %v621 = vpop.f32.mrf.mxu0
        %v622 = vadd.f32 %v547, %v621
        %623 = vmatmul.f32.gmra.mxu0 %v567
        %v624 = vpop.f32.mrf.mxu0
        %v625 = vadd.f32 %v552, %v624
        %626 = vmatmul.f32.gmra.mxu0 %v570
        %v627 = vpop.f32.mrf.mxu0
        %v628 = vadd.f32 %v557, %v627
        %629 = vdwg.mxu0
        %vm630 = vcmp.ge.f32.partialorder %v590, 0.0
        %vm631 = vcmp.ge.f32.partialorder %v619, 0.0
        %vm632 = vcmp.ge.f32.partialorder %v593, 0.0
        %vm633 = vcmp.ge.f32.partialorder %v622, 0.0
        %vm634 = vcmp.ge.f32.partialorder %v596, 0.0
        %vm635 = vcmp.ge.f32.partialorder %v625, 0.0
        %vm636 = vcmp.ge.f32.partialorder %v599, 0.0
        %vm637 = vcmp.ge.f32.partialorder %v628, 0.0
        %v638 = vmul.f32 %v590, 0.2
        %v639 = vmul.f32 %v619, 0.2
        %v640 = vmul.f32 %v593, 0.2
        %v641 = vmul.f32 %v622, 0.2
        %v642 = vmul.f32 %v596, 0.2
        %v643 = vmul.f32 %v625, 0.2
        %v644 = vmul.f32 %v599, 0.2
        %v645 = vmul.f32 %v628, 0.2
        %v646 = vsel %vm630, %v590, %v638
        %v647 = vsel %vm631, %v619, %v639
        %v648 = vsel %vm632, %v593, %v640
        %v649 = vsel %vm633, %v622, %v641
        %v650 = vsel %vm634, %v596, %v642
        %v651 = vsel %vm635, %v625, %v643
        %v652 = vsel %vm636, %v599, %v644
        %v653 = vsel %vm637, %v628, %v645
        %v654 = vadd.f32 %v646, %v647
        %655 = vadd.xlane.f32.xlu0 %v654
        %v656 = vpop.xlane.xlu0 %655
        %v657 = vadd.f32 %v648, %v649
        %658 = vadd.xlane.f32.xlu0 %v657
        %v659 = vpop.xlane.xlu0 %658
        %v660 = vadd.f32 %v650, %v651
        %661 = vadd.xlane.f32.xlu0 %v660
        %v662 = vpop.xlane.xlu0 %661
        %v663 = vadd.f32 %v652, %v653
        %664 = vadd.xlane.f32.xlu0 %v663
        %v665 = vpop.xlane.xlu0 %664
        %v666 = vmul.f32 %v656, 0.00390625
        %v667 = vmul.f32 %v659, 0.00390625
        %v668 = vmul.f32 %v662, 0.00390625
        %v669 = vmul.f32 %v665, 0.00390625
        %v670 = vld [vmem:[%s5] sm:$0xf]
        %v672 = vsel %vm316, %v670, 0
        %674 = vmatpush.msra.mxu0 0.0
        %675 = vmatpush.msra.mxu0 0.0
        %676 = vmatpush.msra.mxu0 0.0
        %677 = vmatpush.msra.mxu0 0.0
        %678 = vmatpush.msra.mxu0 0.0
        %679 = vmatpush.msra.mxu0 0.0
        %680 = vmatpush.msra.mxu0 0.0
        %681 = vmatpush.msra.mxu0 0.0
        %682 = vmatpush.msra.mxu0 0.0
        %683 = vmatpush.msra.mxu0 0.0
        %684 = vmatpush.msra.mxu0 0.0
        %685 = vmatpush.msra.mxu0 0.0
        %686 = vmatpush.msra.mxu0 %v669
        %687 = vmatpush.msra.mxu0 %v668
        %688 = vmatpush.msra.mxu0 %v667
        %689 = vmatpush.msra.mxu0 %v666
        %690 = vmatmul.f32.gmra.mxu0 %v672
        %v691 = vpop.f32.mrf.mxu0
        %v692 = vadd.f32 0.0, %v691
        %693 = vdwg.mxu0
        %v694 = vmax.f32 %v692, 0.0
        %v695 = vld [vmem:[%s6] sm:$0xff]
        %v696 = vld [vmem:[%s6 + $0x8] sm:$0xff]
        %v697 = vld [vmem:[%s6 + $0x10] sm:$0xff]
        %v698 = vld [vmem:[%s6 + $0x18] sm:$0xff]
        %vm699 = vcmask 31744
        %v701 = vsel %vm699, %v695, 0
        %v704 = vsel %vm699, %v696, 0
        %v707 = vsel %vm699, %v697, 0
        %v710 = vsel %vm699, %v698, 0
        %vm712 = vcmask 1043456
        %v714 = vsel %vm712, %v694, 0
        %716 = vmatpush.msra.mxu0 0.0
        %717 = vmatpush.msra.mxu0 0.0
        %718 = vmatpush.msra.mxu0 0.0
        %719 = vmatpush.msra.mxu0 0.0
        %720 = vmatpush.msra.mxu0 0.0
        %721 = vmatpush.msra.mxu0 0.0
        %722 = vmatpush.msra.mxu0 0.0
        %723 = vmatpush.msra.mxu0 0.0
        %724 = vmatpush.msra.mxu0 0.0
        %725 = vmatpush.msra.mxu0 0.0
        %726 = vmatpush.msra.mxu0 0.0
        %727 = vmatpush.msra.mxu0 0.0
        %728 = vmatpush.msra.mxu0 0.0
        %729 = vmatpush.msra.mxu0 0.0
        %730 = vmatpush.msra.mxu0 0.0
        %731 = vmatpush.msra.mxu0 %v714
        %732 = vmatmul.f32.gmra.mxu0 %v701
        %v733 = vpop.f32.mrf.mxu0
        %v734 = vadd.f32 0.0, %v733
        %735 = vmatmul.f32.gmra.mxu0 %v704
        %v736 = vpop.f32.mrf.mxu0
        %v737 = vadd.f32 0.0, %v736
        %738 = vmatmul.f32.gmra.mxu0 %v707
        %v739 = vpop.f32.mrf.mxu0
        %v740 = vadd.f32 0.0, %v739
        %741 = vmatmul.f32.gmra.mxu0 %v710
        %v742 = vpop.f32.mrf.mxu0
        %v743 = vadd.f32 0.0, %v742
        %744 = vdwg.mxu0
        %v745 = vsub.f32 0.0, %v734
        %v746 = vsub.f32 0.0, %v737
        %v747 = vsub.f32 0.0, %v740
        %v748 = vsub.f32 0.0, %v743
        %v749 = vmul.f32 %v745, 1.442695
        %v750 = vpow.pop %v749
        %v751 = vmul.f32 %v746, 1.442695
        %v752 = vpow.pop %v751
        %v753 = vmul.f32 %v747, 1.442695
        %v754 = vpow.pop %v753
        %v755 = vmul.f32 %v748, 1.442695
        %v756 = vpow.pop %v755
        %v757 = vadd.f32 %v750, 1.0
        %v758 = vadd.f32 %v752, 1.0
        %v759 = vadd.f32 %v754, 1.0
        %v760 = vadd.f32 %v756, 1.0
        %v761 = vrcp.pop %v757
        %v762 = vmul.f32 %v757, %v761
        %v763 = vsub.f32 1.0, %v762
        %v764 = vmul.f32 %v761, %v763
        %v765 = vadd.f32 %v761, %v764
        %vm766 = vweird.f32 %v757
        %vm767 = vweird.f32 %v761
        %vm768 = vmor %vm766, %vm767
        %v769 = vsel %vm768, %v761, %v765
        %v770 = vand.u32 2147483647, %v757
        %vm771 = vcmp.eq.f32.partialorder %v770, 8.507059e+37
        %v772 = vand.u32 %v757, 2147483648
        %v773 = vor.u32 1.1754944e-38, %v772
        %v774 = vsel %vm771, %v773, %v769
        %v775 = vmul.f32 1.0, %v774
        %v776 = vrcp.pop %v758
        %v777 = vmul.f32 %v758, %v776
        %v778 = vsub.f32 1.0, %v777
        %v779 = vmul.f32 %v776, %v778
        %v780 = vadd.f32 %v776, %v779
        %vm781 = vweird.f32 %v758
        %vm782 = vweird.f32 %v776
        %vm783 = vmor %vm781, %vm782
        %v784 = vsel %vm783, %v776, %v780
        %v785 = vand.u32 2147483647, %v758
        %vm786 = vcmp.eq.f32.partialorder %v785, 8.507059e+37
        %v787 = vand.u32 %v758, 2147483648
        %v788 = vor.u32 1.1754944e-38, %v787
        %v789 = vsel %vm786, %v788, %v784
        %v790 = vmul.f32 1.0, %v789
        %v791 = vrcp.pop %v759
        %v792 = vmul.f32 %v759, %v791
        %v793 = vsub.f32 1.0, %v792
        %v794 = vmul.f32 %v791, %v793
        %v795 = vadd.f32 %v791, %v794
        %vm796 = vweird.f32 %v759
        %vm797 = vweird.f32 %v791
        %vm798 = vmor %vm796, %vm797
        %v799 = vsel %vm798, %v791, %v795
        %v800 = vand.u32 2147483647, %v759
        %vm801 = vcmp.eq.f32.partialorder %v800, 8.507059e+37
        %v802 = vand.u32 %v759, 2147483648
        %v803 = vor.u32 1.1754944e-38, %v802
        %v804 = vsel %vm801, %v803, %v799
        %v805 = vmul.f32 1.0, %v804
        %v806 = vrcp.pop %v760
        %v807 = vmul.f32 %v760, %v806
        %v808 = vsub.f32 1.0, %v807
        %v809 = vmul.f32 %v806, %v808
        %v810 = vadd.f32 %v806, %v809
        %vm811 = vweird.f32 %v760
        %vm812 = vweird.f32 %v806
        %vm813 = vmor %vm811, %vm812
        %v814 = vsel %vm813, %v806, %v810
        %v815 = vand.u32 2147483647, %v760
        %vm816 = vcmp.eq.f32.partialorder %v815, 8.507059e+37
        %v817 = vand.u32 %v760, 2147483648
        %v818 = vor.u32 1.1754944e-38, %v817
        %v819 = vsel %vm816, %v818, %v814
        %v820 = vmul.f32 1.0, %v819
        %822 = vset.pattern.permute.xlu0 0
        %823 = vperm.xlu0 %822, %v775
        %v824 = vpop.permute.xlu0 %823
        %827 = vset.pattern.permute.xlu0 0
        %828 = vperm.xlu0 %827, %v790
        %v829 = vpop.permute.xlu0 %828
        %832 = vset.pattern.permute.xlu0 0
        %833 = vperm.xlu0 %832, %v805
        %v834 = vpop.permute.xlu0 %833
        %837 = vset.pattern.permute.xlu0 0
        %838 = vperm.xlu0 %837, %v820
        %v839 = vpop.permute.xlu0 %838
        %v841 = vmul.f32 %v646, %v824
        %v842 = vmul.f32 %v647, %v824
        %v843 = vmul.f32 %v648, %v829
        %v844 = vmul.f32 %v649, %v829
        %v845 = vmul.f32 %v650, %v834
        %v846 = vmul.f32 %v651, %v834
        %v847 = vmul.f32 %v652, %v839
        %v848 = vmul.f32 %v653, %v839
        %849 = vst [vmem:[%s298] sm:$0xff] %v841
        %850 = vst [vmem:[%s298 + $0x8] sm:$0xff] %v842
        %851 = vst [vmem:[%s298 + $0x10] sm:$0xff] %v843
        %852 = vst [vmem:[%s298 + $0x18] sm:$0xff] %v844
        %853 = vst [vmem:[%s298 + $0x20] sm:$0xff] %v845
        %854 = vst [vmem:[%s298 + $0x28] sm:$0xff] %v846
        %855 = vst [vmem:[%s298 + $0x30] sm:$0xff] %v847
        %856 = vst [vmem:[%s298 + $0x38] sm:$0xff] %v848
        %s857 = sand.u32 %s184, 1
        %s858 = scalar_lea.sflag [#allocation4], %s857
        %s859 = sand.u32 %s184, 1
        %s860 = smul.addr %s859, 64
        %s861 = scalar_lea.vmem [#allocation5], %s860
        // Predicated region
        $region53: #{tpu_custom_call.1} parent=47 // pred_check
          %p862 = pneg %p194
        $region54: #{tpu_custom_call.1} parent=47 // pred_check_branch
          %864 = sbr.rel (%p862) target = $region56
        $region55: #{tpu_custom_call.1} parent=47 // pred_region
          %s865 = smul.u32 2, %s24
          %867 = vsyncadd %s858, 0
          %s868 = smul.addr %s865, 8
          %s869 = scalar_lea.hbm %s7, %s868
          %s870 = sshll.u32 %s861, 4
          %s871 = int_to_ptr.vmem [resolvable:$true] %s870
          %s872 = sshll.u32 %s869, 4
          %s873 = int_to_ptr.hbm [resolvable:$true] %s872
          %878 = dma.vmem_to_hbm [thread:$0]  %s871, 1024, %s873, %s858, 256, 512, 16
        $region56: #{tpu_custom_call.1} parent=47 // pred_fallthru
          _
      $region48: #{tpu_custom_call.1} parent=5 // pred_fallthru
        _
      %p879 = scmp.le.s32.totalorder 2, %s19
      // Predicated region
      $region57: #{tpu_custom_call.1} parent=5 // pred_check
        %p880 = pneg %p879
      $region58: #{tpu_custom_call.1} parent=5 // pred_check_branch
        %882 = sbr.rel (%p880) target = $region60
      $region59: #{tpu_custom_call.1} parent=5 // pred_region
        %s883 = ssub.s32 %s19, 2
        // Predicated region
        $region61: #{tpu_custom_call.1} parent=59 // pred_check
          %p884 = pneg %p200
        $region62: #{tpu_custom_call.1} parent=59 // pred_check_branch
          %886 = sbr.rel (%p884) target = $region64
        $region63: #{tpu_custom_call.1} parent=59 // pred_region
          %s887 = sand.u32 %s185, 1
          %s888 = scalar_lea.sflag [#allocation4], %s887
          %s889 = sand.u32 %s185, 1
          %s890 = smul.addr %s889, 64
          %s891 = scalar_lea.vmem [#allocation5], %s890
          %893 = dma.done %s888, 1024
        $region64: #{tpu_custom_call.1} parent=59 // pred_fallthru
          _
      $region60: #{tpu_custom_call.1} parent=5 // pred_fallthru
        _
    $region6: #{tpu_custom_call.1} parent=1 // loop_footer
      %s23 = sadd.s32 1, %s19
    $region7: #{tpu_custom_call.1} parent=1 // loop_footer_branch
      %18 = sbr.rel target = $region3
    $region8: #{tpu_custom_call.1} parent=1 // loop_exit
      _
    %894 = vsyncpa [#allocation3], 1
    %s895 = scalar_lea.sflag [#allocation3], 1
    %896 = vsyncpa %s895, 1
    %897 = vsyncpa [#allocation4], 1
    %s898 = scalar_lea.sflag [#allocation4], 1
    %899 = vsyncpa %s898, 1

</llo_original>
